<compile_context>
chip_gen: v5e
topology: v5e:2x2
jax: 0.10.0
libtpu: 0.0.40
codegen_flags: <defaults>
</compile_context>

<pallas_src>
import jax
import jax.numpy as jnp
import numpy as np
from jax.experimental import pallas as pl
from jax.experimental.pallas import tpu as pltpu


# PyTorch F.pad mode names -> jnp.pad mode names.
_PAD_MODE = {
    "zeros": "constant",
    "constant": "constant",
    "reflect": "reflect",
    "replicate": "edge",
    "circular": "wrap",
}


def _round_up(x, m):
    return (x + m - 1) // m * m


def masked_conv1d_kernel(x_ref, w_ref, b_ref, o_ref):
    # x_ref : (K*C_in, L_tile)   im2col'd input slab (one batch elem, one L tile)
    # w_ref : (C_out, K*C_in)    masked, re-laid-out weights
    # b_ref : (C_out, 1)         bias (f32)
    # o_ref : (C_out, L_tile)    output tile
    acc = jnp.dot(w_ref[...], x_ref[...], preferred_element_type=jnp.float32)
    o_ref[...] = (acc + b_ref[...]).astype(o_ref.dtype)


def masked_conv1d(x, weight, mask, bias=None, *, padding_mode="zeros",
                  compute_dtype=None, l_tile=512):
    """Equivalent of MaskedConv1d.forward.

    x      : (N, C_in, L)      float32
    weight : (C_out, C_in, K)  float32
    mask   : (C_out, C_in)     float32 (0/1)
    bias   : (C_out,) or None  float32
    compute_dtype : optional dtype (e.g. jnp.bfloat16) for the MXU operands;
                    accumulation stays f32, output dtype == x.dtype.
    """
    N, C_in, L = x.shape
    C_out, C_in_w, K = weight.shape
    assert C_in_w == C_in and mask.shape == (C_out, C_in)

    out_dtype = x.dtype
    if bias is None:
        bias = jnp.zeros((C_out,), jnp.float32)

    # "same"-style padding, matching the PyTorch module (odd K -> symmetric).
    total_pad = K - 1
    left = total_pad // 2
    right = total_pad - left
    mode = _PAD_MODE[padding_mode]
    x_pad = jnp.pad(x, ((0, 0), (0, 0), (left, right)), mode=mode)

    # im2col over kernel taps: x_col[n, k*C_in + c, l] = x_pad[n, c, l + k]
    cols = jnp.stack([x_pad[:, :, k:k + L] for k in range(K)], axis=1)
    x_col = cols.reshape(N, K * C_in, L)

    # Weight relayout to match im2col ordering:
    #   w2[o, k*C_in + c] = (weight * mask)[o, c, k]
    w_masked = weight * mask[:, :, None]
    w2 = jnp.transpose(w_masked, (0, 2, 1)).reshape(C_out, K * C_in)
    b2 = bias.reshape(C_out, 1).astype(jnp.float32)

    if compute_dtype is not None:
        x_col = x_col.astype(compute_dtype)
        w2 = w2.astype(compute_dtype)

    KC = K * C_in

    # Lane-dense output tiles: multiple of 128, bounded per-step VMEM.
    l_tile = _round_up(min(l_tile, _round_up(L, 128)), 128)
    L_pad = _round_up(L, l_tile)
    if L_pad != L:
        x_col = jnp.pad(x_col, ((0, 0), (0, 0), (0, L_pad - L)))

    grid = (N, L_pad // l_tile)

    out = pl.pallas_call(
        masked_conv1d_kernel,
        out_shape=jax.ShapeDtypeStruct((N, C_out, L_pad), out_dtype),
        grid_spec=pltpu.PrefetchScalarGridSpec(
            num_scalar_prefetch=0,
            grid=grid,
            in_specs=[
                # one (batch, L-tile) slab per grid step
                pl.BlockSpec((pl.Squeezed(), KC, l_tile),
                             lambda n, l: (n, 0, l)),
                # weights / bias: same full block at every grid step (resident)
                pl.BlockSpec((C_out, KC), lambda n, l: (0, 0)),
                pl.BlockSpec((C_out, 1), lambda n, l: (0, 0)),
            ],
            out_specs=pl.BlockSpec((pl.Squeezed(), C_out, l_tile),
                                   lambda n, l: (n, 0, l)),
        ),
        compiler_params=pltpu.CompilerParams(
            dimension_semantics=("parallel", "parallel")),
    )(x_col, w2, b2)

    return out[:, :, :L]


def reference_conv1d(x, weight, mask, bias, *, padding_mode="zeros"):
    # Pure-JAX reference (lax conv, highest precision) for correctness checks.
    K = weight.shape[-1]
    left = (K - 1) // 2
    right = (K - 1) - left
    x_pad = jnp.pad(x, ((0, 0), (0, 0), (left, right)),
                    mode=_PAD_MODE[padding_mode])
    w_masked = weight * mask[:, :, None]
    y = jax.lax.conv_general_dilated(
        x_pad, w_masked, window_strides=(1,), padding=[(0, 0)],
        dimension_numbers=("NCH", "OIH", "NCH"),
        precision=jax.lax.Precision.HIGHEST)
    return y + bias[None, :, None]


if __name__ == "__main__":
    # Small, deterministic setup consistent with the module's __init__.
    N, C_in, C_out, K, L = 2, 4, 6, 3, 16

    key = jax.random.PRNGKey(0)
    kx, kw, kb = jax.random.split(key, 3)

    init_k = float(np.sqrt(1.0 / (C_in * K)))
    x = jax.random.normal(kx, (N, C_in, L), dtype=jnp.float32)
    weight = jax.random.uniform(kw, (C_out, C_in, K), dtype=jnp.float32,
                                minval=-init_k, maxval=init_k)
    bias = jax.random.uniform(kb, (C_out,), dtype=jnp.float32,
                              minval=-init_k, maxval=init_k)
    # Deterministic 0/1 mask of shape (C_out, C_in) (checkerboard pattern).
    mask = ((jnp.arange(C_out)[:, None] + jnp.arange(C_in)[None, :]) % 2
            ).astype(jnp.float32)

    # f32 path: match against the highest-precision lax reference.
    out = masked_conv1d(x, weight, mask, bias)
    out = jax.block_until_ready(out)
    ref = reference_conv1d(x, weight, mask, bias)
    assert out.shape == (N, C_out, L)
    np.testing.assert_allclose(np.asarray(out), np.asarray(ref),
                               rtol=1e-5, atol=1e-5)

    # bf16-operand / f32-accumulate path: compare against a reference built
    # from the same bf16-quantized operands (bf16*bf16 products are exact in
    # f32, so only summation-order noise remains).
    out_bf16 = masked_conv1d(x, weight, mask, bias,
                             compute_dtype=jnp.bfloat16)
    out_bf16 = jax.block_until_ready(out_bf16)
    ref_bf16 = reference_conv1d(
        x.astype(jnp.bfloat16).astype(jnp.float32),
        weight.astype(jnp.bfloat16).astype(jnp.float32),
        mask, bias)
    np.testing.assert_allclose(np.asarray(out_bf16), np.asarray(ref_bf16),
                               rtol=1e-3, atol=1e-4)

    print("KERNEL_OK")
</pallas_src>

<mosaic_0001>
module attributes {stable_mosaic.version = 11 : i64} {
  func.func @masked_conv1d_kernel(%arg0: i32, %arg1: i32, %arg2: memref<1x12x128xf32, #tpu.memory_space<vmem>>, %arg3: memref<6x12xf32, #tpu.memory_space<vmem>>, %arg4: memref<6x1xf32, #tpu.memory_space<vmem>>, %arg5: memref<1x6x128xf32, #tpu.memory_space<vmem>>) attributes {dimension_semantics = [#tpu.dimension_semantics<parallel>, #tpu.dimension_semantics<parallel>], iteration_bounds = array<i64: 2, 1>, scalar_prefetch = 0 : i64, scratch_operands = 0 : i64, tpu.core_type = #tpu.core_type<tc>, window_params = [{transform_indices = @transform_0, window_bounds = array<i64: 1, 12, 128>}, {pipeline_mode = #tpu.pipeline_mode<synchronous>, transform_indices = @transform_1, window_bounds = array<i64: 6, 12>}, {pipeline_mode = #tpu.pipeline_mode<synchronous>, transform_indices = @transform_2, window_bounds = array<i64: 6, 1>}, {transform_indices = @transform_3, window_bounds = array<i64: 1, 6, 128>}]} {
    %c0 = arith.constant 0 : index
    %c0_0 = arith.constant 0 : index
    %0 = vector.load %arg3[%c0, %c0_0] : memref<6x12xf32, #tpu.memory_space<vmem>>, vector<6x12xf32>
    %c0_1 = arith.constant 0 : index
    %c0_2 = arith.constant 0 : index
    %c0_3 = arith.constant 0 : index
    %1 = vector.load %arg2[%c0_1, %c0_2, %c0_3] : memref<1x12x128xf32, #tpu.memory_space<vmem>>, vector<1x12x128xf32>
    %2 = vector.shape_cast %1 : vector<1x12x128xf32> to vector<12x128xf32>
    %cst = arith.constant dense<0.000000e+00> : vector<6x128xf32>
    %3 = tpu.matmul %0, %2, %cst {dimension_numbers = #tpu.dot_dimension_numbers<[1], [0], [0], [1], [0, 0, 1, 1], [], []>} : vector<6x12xf32>, vector<12x128xf32>, vector<6x128xf32> -> vector<6x128xf32>
    %c0_4 = arith.constant 0 : index
    %c0_5 = arith.constant 0 : index
    %4 = vector.load %arg4[%c0_4, %c0_5] : memref<6x1xf32, #tpu.memory_space<vmem>>, vector<6x1xf32>
    %5 = vector.broadcast %4 : vector<6x1xf32> to vector<6x128xf32>
    %6 = arith.addf %3, %5 : vector<6x128xf32>
    %c0_6 = arith.constant 0 : index
    %c0_7 = arith.constant 0 : index
    %c0_8 = arith.constant 0 : index
    %7 = vector.load %arg5[%c0_6, %c0_7, %c0_8] : memref<1x6x128xf32, #tpu.memory_space<vmem>>, vector<1x6x128xf32>
    %8 = vector.shape_cast %7 : vector<1x6x128xf32> to vector<6x128xf32>
    %9 = vector.shape_cast %6 : vector<6x128xf32> to vector<1x6x128xf32>
    tpu.vector_store %arg5[%c0_6, %c0_7, %c0_8], %9 {strides = array<i32>} : memref<1x6x128xf32, #tpu.memory_space<vmem>>, vector<1x6x128xf32>,
    return
  }
  func.func @transform_0(%arg0: i32, %arg1: i32) -> (i32, i32, i32) {
    %c0_i32 = arith.constant 0 : i32
    %c0_i32_0 = arith.constant 0 : i32
    return %arg0, %c0_i32, %arg1 : i32, i32, i32
  }
  func.func @transform_1(%arg0: i32, %arg1: i32) -> (i32, i32) {
    %c0_i32 = arith.constant 0 : i32
    %c0_i32_0 = arith.constant 0 : i32
    %c0_i32_1 = arith.constant 0 : i32
    return %c0_i32, %c0_i32_0 : i32, i32
  }
  func.func @transform_2(%arg0: i32, %arg1: i32) -> (i32, i32) {
    %c0_i32 = arith.constant 0 : i32
    %c0_i32_0 = arith.constant 0 : i32
    %c0_i32_1 = arith.constant 0 : i32
    return %c0_i32, %c0_i32_0 : i32, i32
  }
  func.func @transform_3(%arg0: i32, %arg1: i32) -> (i32, i32, i32) {
    %c0_i32 = arith.constant 0 : i32
    %c0_i32_0 = arith.constant 0 : i32
    return %arg0, %c0_i32, %arg1 : i32, i32, i32
  }
}

</mosaic_0001>

<llo_original>
// kernel: tpu_custom_call.1
$region0: #{tpu_custom_call.1}
  #allocation0 [shape = 'u32[]', space=smem, size = 0x4, offset = 0x4, fixed_abs, tag = 'smem constant byte address 0x4 - core index']
  #allocation1 [shape = 'u32[72,128]{1,0:T(1,128)}', space=vmem, size = 0x9000, scoped, tag = 'internal scratch']
  %s0 = inlined_call_operand.vmem [shape: f32[2,12,128], index: 0, kind: input, shape index: {}]
  %s1 = inlined_call_operand.vmem [shape: f32[6,12], index: 1, kind: input, shape index: {}]
  %s2 = inlined_call_operand.vmem [shape: f32[6,1], index: 2, kind: input, shape index: {}]
  %s3 = inlined_call_operand.vmem [shape: f32[2,6,128], index: 3, kind: output, shape index: {}]
  %s4 = sld [smem:[#allocation0]]
  $region45: #{tpu_custom_call.1} parent=0
    _
  %s6 = ssub.s32 1, %s4
  %s7 = scalar_select 0, %s6, %s4
  loop: start=0, step=1, limit=4
  $region2: #{tpu_custom_call.1} parent=0 // loop_pre_header
    _
  $region3: #{tpu_custom_call.1} parent=0 // loop_header
    %s9 = sphi 0, %s13
    %p10 = scmp.ge.s32.totalorder %s9, 4
    %s16 = sphi 0, %s28
    %s17 = sphi 0, %s24
    %s18 = sphi 0, %s16
    %s19 = sphi 0, %s17
    %s20 = sphi 0, %s18
    %s21 = sphi 0, %s19
    %s33 = sphi 0, %s35
    %s36 = sphi 0, %s33
    %s37 = sphi 0, %s36
    %s53 = sphi 0, %s37
    %s57 = sphi 0, %s57
    %s59 = sphi 0, %s57
    %s60 = sphi 0, %s59
    %s74 = sphi 0, %s60
    %s78 = sphi 0, %s78
    %s80 = sphi 0, %s78
    %s81 = sphi 0, %s80
    %s95 = sphi 0, %s81
    %s103 = sphi 0, %s105
    %s106 = sphi 0, %s103
    %s107 = sphi 0, %s106
    %s123 = sphi 0, %s107
  $region4: #{tpu_custom_call.1} parent=0 // loop_header_branch
    %12 = sbr.rel (%p10) target = $region8
  $region5: #{tpu_custom_call.1} parent=0 // loop_body
    %s14 = ssub.s32 %s9, 1
    %s15 = ssub.s32 %s9, 2
    %s22 = sadd.s32 1, %s17
    %p23 = scmp.ge.s32.totalorder %s22, 1
    %s24 = scalar_select %p23, 0, %s22
    %s25 = sadd.s32 1, %s16
    %s26 = scalar_select %p23, %s25, %s16
    %p27 = scmp.ge.s32.totalorder %s26, 2
    %s28 = scalar_select %p27, 0, %s26
    %s29 = ssub.s32 %s16, %s28
    %s30 = ssub.s32 %s17, %s24
    %s31 = sor.u32 %s29, %s30
    %p32 = scmp.eq.s32.totalorder %s31, 0
    %s34 = sadd.s32 %s33, 1
    %s35 = scalar_select %p32, %s33, %s34
    %p38 = pneg %p32
    %p39 = scmp.eq.s32.totalorder %s9, 1
    %p40 = por %p38, %p39
    %p41 = scmp.ne.s32.totalorder %s33, %s36
    %p42 = scmp.eq.s32.totalorder %s9, 0
    %p43 = por %p41, %p42
    %p44 = scmp.ne.s32.totalorder %s33, %s36
    %p45 = scmp.eq.s32.totalorder %s14, 1
    %p46 = por %p44, %p45
    %p47 = scmp.ne.s32.totalorder %s36, %s37
    %p48 = scmp.eq.s32.totalorder %s14, 0
    %p49 = por %p47, %p48
    %p50 = scmp.ne.s32.totalorder %s36, %s37
    %p51 = scmp.eq.s32.totalorder %s15, 1
    %p52 = por %p50, %p51
    %p54 = scmp.ne.s32.totalorder %s37, %s53
    %p55 = scmp.eq.s32.totalorder %s15, 0
    %p56 = por %p54, %p55
    %s58 = sadd.s32 %s57, 1
    %p61 = scmp.eq.s32.totalorder %s9, 1
    %p62 = scmp.ne.s32.totalorder %s57, %s59
    %p63 = scmp.eq.s32.totalorder %s9, 0
    %p64 = por %p62, %p63
    %p65 = scmp.ne.s32.totalorder %s57, %s59
    %p66 = scmp.eq.s32.totalorder %s14, 1
    %p67 = por %p65, %p66
    %p68 = scmp.ne.s32.totalorder %s59, %s60
    %p69 = scmp.eq.s32.totalorder %s14, 0
    %p70 = por %p68, %p69
    %p71 = scmp.ne.s32.totalorder %s59, %s60
    %p72 = scmp.eq.s32.totalorder %s15, 1
    %p73 = por %p71, %p72
    %p75 = scmp.ne.s32.totalorder %s60, %s74
    %p76 = scmp.eq.s32.totalorder %s15, 0
    %p77 = por %p75, %p76
    %s79 = sadd.s32 %s78, 1
    %p82 = scmp.eq.s32.totalorder %s9, 1
    %p83 = scmp.ne.s32.totalorder %s78, %s80
    %p84 = scmp.eq.s32.totalorder %s9, 0
    %p85 = por %p83, %p84
    %p86 = scmp.ne.s32.totalorder %s78, %s80
    %p87 = scmp.eq.s32.totalorder %s14, 1
    %p88 = por %p86, %p87
    %p89 = scmp.ne.s32.totalorder %s80, %s81
    %p90 = scmp.eq.s32.totalorder %s14, 0
    %p91 = por %p89, %p90
    %p92 = scmp.ne.s32.totalorder %s80, %s81
    %p93 = scmp.eq.s32.totalorder %s15, 1
    %p94 = por %p92, %p93
    %p96 = scmp.ne.s32.totalorder %s81, %s95
    %p97 = scmp.eq.s32.totalorder %s15, 0
    %p98 = por %p96, %p97
    %s99 = ssub.s32 %s16, %s28
    %s100 = ssub.s32 %s17, %s24
    %s101 = sor.u32 %s99, %s100
    %p102 = scmp.eq.s32.totalorder %s101, 0
    %s104 = sadd.s32 %s103, 1
    %s105 = scalar_select %p102, %s103, %s104
    %p108 = pneg %p102
    %p109 = scmp.eq.s32.totalorder %s9, 1
    %p110 = por %p108, %p109
    %p111 = scmp.ne.s32.totalorder %s103, %s106
    %p112 = scmp.eq.s32.totalorder %s9, 0
    %p113 = por %p111, %p112
    %p114 = scmp.ne.s32.totalorder %s103, %s106
    %p115 = scmp.eq.s32.totalorder %s14, 1
    %p116 = por %p114, %p115
    %p117 = scmp.ne.s32.totalorder %s106, %s107
    %p118 = scmp.eq.s32.totalorder %s14, 0
    %p119 = por %p117, %p118
    %p120 = scmp.ne.s32.totalorder %s106, %s107
    %p121 = scmp.eq.s32.totalorder %s15, 1
    %p122 = por %p120, %p121
    %p124 = scmp.ne.s32.totalorder %s107, %s123
    %p125 = scmp.eq.s32.totalorder %s15, 0
    %p126 = por %p124, %p125
    %p127 = scmp.le.s32.totalorder 1, %s9
    %p128 = scmp.lt.s32.totalorder %s9, 3
    %p129 = pnand %p127, %p128
    %p130 = pneg %p129
    // Predicated region
    $region9: #{tpu_custom_call.1} parent=5 // pred_check
      _
    $region10: #{tpu_custom_call.1} parent=5 // pred_check_branch
      %132 = sbr.rel (%p129) target = $region12
    $region11: #{tpu_custom_call.1} parent=5 // pred_region
      %s133 = ssub.s32 %s9, 1
      // Predicated region
      $region13: #{tpu_custom_call.1} parent=11 // pred_check
        %p134 = pneg %p70
      $region14: #{tpu_custom_call.1} parent=11 // pred_check_branch
        %136 = sbr.rel (%p134) target = $region16
      $region15: #{tpu_custom_call.1} parent=11 // pred_region
        _
      $region16: #{tpu_custom_call.1} parent=11 // pred_fallthru
        _
      // Predicated region
      $region17: #{tpu_custom_call.1} parent=11 // pred_check
        %p137 = pneg %p91
      $region18: #{tpu_custom_call.1} parent=11 // pred_check_branch
        %139 = sbr.rel (%p137) target = $region20
      $region19: #{tpu_custom_call.1} parent=11 // pred_region
        _
      $region20: #{tpu_custom_call.1} parent=11 // pred_fallthru
        _
    $region12: #{tpu_custom_call.1} parent=5 // pred_fallthru
      _
    %p140 = scmp.lt.s32.totalorder %s9, 2
    // Predicated region
    $region21: #{tpu_custom_call.1} parent=5 // pred_check
      %p141 = pneg %p140
    $region22: #{tpu_custom_call.1} parent=5 // pred_check_branch
      %143 = sbr.rel (%p141) target = $region24
    $region23: #{tpu_custom_call.1} parent=5 // pred_region
      // Predicated region
      $region25: #{tpu_custom_call.1} parent=23 // pred_check
        %p144 = pneg %p43
      $region26: #{tpu_custom_call.1} parent=23 // pred_check_branch
        %146 = sbr.rel (%p144) target = $region28
      $region27: #{tpu_custom_call.1} parent=23 // pred_region
        %p147 = scmp.lt.s32.totalorder %s16, 1
        %s148 = scalar_select %p147, %s16, 1
        %p149 = scmp.lt.s32.totalorder %s17, 0
        %s150 = scalar_select %p149, %s17, 0
        %s151 = smul.addr %s148, 2
        %s152 = sadd.s32 %s150, %s151
        %s153 = smul.addr %s152, 8
        %s154 = scalar_lea.vmem %s0, %s153
      $region28: #{tpu_custom_call.1} parent=23 // pred_fallthru
        _
    $region24: #{tpu_custom_call.1} parent=5 // pred_fallthru
      _
    %p155 = scmp.le.s32.totalorder 1, %s9
    %p156 = scmp.lt.s32.totalorder %s9, 3
    %p157 = pnand %p155, %p156
    %p158 = pneg %p157
    // Predicated region
    $region29: #{tpu_custom_call.1} parent=5 // pred_check
      _
    $region30: #{tpu_custom_call.1} parent=5 // pred_check_branch
      %160 = sbr.rel (%p157) target = $region32
    $region31: #{tpu_custom_call.1} parent=5 // pred_region
      %s161 = ssub.s32 %s9, 1
      %p162 = scmp.lt.s32.totalorder %s18, 1
      %s163 = scalar_select %p162, %s18, 1
      %p164 = scmp.lt.s32.totalorder %s19, 0
      %s165 = scalar_select %p164, %s19, 0
      %s166 = smul.addr %s163, 2
      %s167 = sadd.s32 %s165, %s166
      %s168 = smul.addr %s167, 8
      %s169 = scalar_lea.vmem %s0, %s168
      %p170 = pneg %p49
      %p171 = pneg %p46
      %p172 = pneg %p70
      %p173 = pneg %p67
      %p174 = pneg %p91
      %p175 = pneg %p88
      %p176 = pneg %p119
      %p177 = pneg %p116
      %p178 = scmp.lt.s32.totalorder %s18, 1
      %s179 = scalar_select %p178, %s18, 1
      %p180 = scmp.lt.s32.totalorder %s19, 0
      %s181 = scalar_select %p180, %s19, 0
      %s182 = sadd.s32 %s181, %s179
      %s183 = smul.addr %s182, 8
      %s184 = scalar_lea.vmem %s3, %s183
      %p185 = scmp.lt.s32.totalorder %s18, 1
      %s186 = scalar_select %p185, %s18, 1
      %p187 = scmp.lt.s32.totalorder %s19, 0
      %s188 = scalar_select %p187, %s19, 0
      %s189 = smul.addr %s186, 2
      %s190 = sadd.s32 %s188, %s189
      %s191 = smul.addr %s190, 8
      %s192 = scalar_lea.vmem %s0, %s191
      %p193 = scmp.lt.s32.totalorder %s18, 1
      %s194 = scalar_select %p193, %s18, 1
      %p195 = scmp.lt.s32.totalorder %s19, 0
      %s196 = scalar_select %p195, %s19, 0
      %s197 = sadd.s32 %s196, %s194
      %s198 = smul.addr %s197, 8
      %s199 = scalar_lea.vmem %s3, %s198
      %v200 = vld [vmem:[%s1] sm:$0x3f]
      %v201 = vld [vmem:[%s192] sm:$0xff]
      %v202 = vld [vmem:[%s192 + $0x8] sm:$0xf]
      %v203 = vld [vmem:[%s2] sm:$0x3f]
      %205 = vset.pattern.permute.xlu0 0
      %206 = vperm.xlu0 %205, %v203
      %v207 = vpop.permute.xlu0 %206
      %vm209 = vcmask 97280
      %v211 = vsel %vm209, %v200, 0
      %vm213 = vcmask 1043456
      %v215 = vsel %vm213, %v202, 0
      %217 = vmatpush.msra.mxu0 0.0
      %218 = vmatpush.msra.mxu0 0.0
      %219 = vmatpush.msra.mxu0 0.0
      %220 = vmatpush.msra.mxu0 0.0
      %221 = vmatpush.msra.mxu0 0.0
      %222 = vmatpush.msra.mxu0 0.0
      %223 = vmatpush.msra.mxu0 0.0
      %224 = vmatpush.msra.mxu0 0.0
      %225 = vmatpush.msra.mxu0 0.0
      %226 = vmatpush.msra.mxu0 0.0
      %227 = vmatpush.msra.mxu0 0.0
      %228 = vmatpush.msra.mxu0 0.0
      %229 = vmatpush.msra.mxu0 0.0
      %230 = vmatpush.msra.mxu0 0.0
      %231 = vmatpush.msra.mxu0 %v215
      %232 = vmatpush.msra.mxu0 %v201
      %233 = vmatmul.f32.gmra.mxu0 %v211
      %v234 = vpop.f32.mrf.mxu0
      %v235 = vadd.f32 %v207, %v234
      %236 = vdwg.mxu0
      %237 = vst [vmem:[%s199] sm:$0x3f] %v235
      %p238 = scmp.lt.s32.totalorder %s18, 1
      %s239 = scalar_select %p238, %s18, 1
      %p240 = scmp.lt.s32.totalorder %s19, 0
      %s241 = scalar_select %p240, %s19, 0
      %s242 = sadd.s32 %s241, %s239
      %s243 = smul.addr %s242, 8
      %s244 = scalar_lea.vmem %s3, %s243
      // Predicated region
      $region33: #{tpu_custom_call.1} parent=31 // pred_check
        %p245 = pneg %p116
      $region34: #{tpu_custom_call.1} parent=31 // pred_check_branch
        %247 = sbr.rel (%p245) target = $region36
      $region35: #{tpu_custom_call.1} parent=31 // pred_region
        _
      $region36: #{tpu_custom_call.1} parent=31 // pred_fallthru
        _
    $region32: #{tpu_custom_call.1} parent=5 // pred_fallthru
      _
    %p248 = scmp.le.s32.totalorder 2, %s9
    // Predicated region
    $region37: #{tpu_custom_call.1} parent=5 // pred_check
      %p249 = pneg %p248
    $region38: #{tpu_custom_call.1} parent=5 // pred_check_branch
      %251 = sbr.rel (%p249) target = $region40
    $region39: #{tpu_custom_call.1} parent=5 // pred_region
      %s252 = ssub.s32 %s9, 2
      // Predicated region
      $region41: #{tpu_custom_call.1} parent=39 // pred_check
        %p253 = pneg %p122
      $region42: #{tpu_custom_call.1} parent=39 // pred_check_branch
        %255 = sbr.rel (%p253) target = $region44
      $region43: #{tpu_custom_call.1} parent=39 // pred_region
        %p256 = scmp.lt.s32.totalorder %s20, 1
        %s257 = scalar_select %p256, %s20, 1
        %p258 = scmp.lt.s32.totalorder %s21, 0
        %s259 = scalar_select %p258, %s21, 0
        %s260 = sadd.s32 %s259, %s257
        %s261 = smul.addr %s260, 8
        %s262 = scalar_lea.vmem %s3, %s261
      $region44: #{tpu_custom_call.1} parent=39 // pred_fallthru
        _
    $region40: #{tpu_custom_call.1} parent=5 // pred_fallthru
      _
  $region6: #{tpu_custom_call.1} parent=0 // loop_footer
    %s13 = sadd.s32 1, %s9
  $region7: #{tpu_custom_call.1} parent=0 // loop_footer_branch
    %8 = sbr.rel target = $region3
  $region8: #{tpu_custom_call.1} parent=0 // loop_exit
    _

</llo_original>
